<compile_context>
chip_gen: v7x
topology: tpu7x:2x2x1
jax: 0.10.0
libtpu: 0.0.40
codegen_flags: <defaults>
</compile_context>

<pallas_src>
import functools

import jax
import jax.numpy as jnp
from jax import lax
from jax.experimental import pallas as pl
from jax.experimental.pallas import tpu as pltpu


def _round_up(v, m):
    return ((v + m - 1) // m) * m


# ---------------------------------------------------------------------------
# Fused kernel: scores -> (mask/tanh/)softmax -> attention pool
# ---------------------------------------------------------------------------
def _matching_attention_kernel(m_ref, xt_ref, mask_ref, pool_ref, alpha_ref,
                               *, att_type, seq_len):
    # Per grid step (one block of BB batch elements):
    #   m_ref    (BB, L_pad, D_pad)  bf16  memory M (batch-major, feat on lanes)
    #   xt_ref   (BB, 1, D_pad)      bf16  transformed candidate x_t
    #   mask_ref (BB, 1, L_pad)      f32   user mask, zero past seq_len / batch
    m = m_ref[...]
    xt = xt_ref[...]
    msk = mask_ref[...]

    # scores[b, 0, l] = <x_t[b], M[b, l, :]>  (batched, contraction on lanes)
    scores = jnp.einsum('bod,bld->bol', xt, m,
                        preferred_element_type=jnp.float32)   # (BB, 1, L_pad)

    if att_type == 'general2':
        # PyTorch: bmm(x_, M_ * mask) * mask -> tanh -> softmax -> * mask ->
        # renormalise.  The softmax max/Z cancel under the renormalisation, so
        # alpha = exp(tanh(scores * mask^2)) * mask / sum(...).  Zero-padded
        # positions (seq or batch padding) have mask == 0 and drop out exactly.
        t = jnp.tanh(scores * msk * msk)
        e = jnp.exp(t) * msk
        denom = jnp.sum(e, axis=-1, keepdims=True)
        alpha = e * pl.reciprocal(jnp.maximum(denom, 1e-30), approx=True)
    else:
        # plain softmax over the valid sequence positions ('dot' / 'general').
        valid = lax.broadcasted_iota(jnp.int32, scores.shape, 2) < seq_len
        s = jnp.where(valid, scores, -1e30)
        s_max = jnp.max(s, axis=-1, keepdims=True)
        e = jnp.where(valid, jnp.exp(s - s_max), 0.0)
        denom = jnp.sum(e, axis=-1, keepdims=True)
        alpha = e * pl.reciprocal(denom, approx=True)

    # attn_pool[b, 0, :] = alpha[b] @ M[b]  (reuses the VMEM-resident M block)
    pool = jnp.einsum('bol,bld->bod', alpha.astype(jnp.bfloat16), m,
                      preferred_element_type=jnp.float32)     # (BB, 1, D_pad)

    alpha_ref[...] = alpha
    pool_ref[...] = pool


# ---------------------------------------------------------------------------
# Wrapper: candidate transform + padding / layout plumbing + pallas_call
# ---------------------------------------------------------------------------
def matching_attention(M, x, W=None, b=None, mask=None, att_type='general'):
    """M: (L, B, mem_dim), x: (B, cand_dim), mask: (B, L) or None.
    Returns (attn_pool [B, mem_dim], alpha [B, 1, L])."""
    L, B, Dm = M.shape
    Dc = x.shape[1]
    if att_type == 'dot':
        assert Dm == Dc

    # Candidate transform (tiny, batch-shared weight): do it once, in f32.
    if att_type == 'dot':
        xt = x.astype(jnp.float32)
    else:
        xt = x.astype(jnp.float32) @ W.astype(jnp.float32)
        if b is not None:
            xt = xt + b.astype(jnp.float32)

    L_pad = _round_up(max(L, 1), 16)      # bf16 sublane tile friendly
    Dm_pad = _round_up(Dm, 128)           # lane-dense feature dim

    # Batch block: amortise per-grid-step overhead while keeping the
    # (double-buffered) M block comfortably inside VMEM.
    bytes_per_batch = L_pad * Dm_pad * 2          # bf16 M per batch element
    BB = max(1, min(8, B, (4 * 1024 * 1024) // max(bytes_per_batch, 1)))
    B_pad = _round_up(B, BB)

    # batch-major, feature-on-lanes, zero padded; bf16 MXU operands.
    M_p = (jnp.zeros((B_pad, L_pad, Dm_pad), jnp.float32)
           .at[:B, :L, :Dm].set(jnp.transpose(M, (1, 0, 2)))
           .astype(jnp.bfloat16))
    xt_p = (jnp.zeros((B_pad, 1, Dm_pad), jnp.float32)
            .at[:B, 0, :Dm].set(xt).astype(jnp.bfloat16))
    if mask is None:
        mask = jnp.ones((B, L), jnp.float32)
    mask_p = (jnp.zeros((B_pad, 1, L_pad), jnp.float32)
              .at[:B, 0, :L].set(mask.astype(jnp.float32)))

    kernel = functools.partial(_matching_attention_kernel,
                               att_type=att_type, seq_len=L)

    pool_p, alpha_p = pl.pallas_call(
        kernel,
        grid=(B_pad // BB,),
        in_specs=[
            pl.BlockSpec((BB, L_pad, Dm_pad), lambda i: (i, 0, 0)),   # M
            pl.BlockSpec((BB, 1, Dm_pad), lambda i: (i, 0, 0)),       # x_t
            pl.BlockSpec((BB, 1, L_pad), lambda i: (i, 0, 0)),        # mask
        ],
        out_specs=[
            pl.BlockSpec((BB, 1, Dm_pad), lambda i: (i, 0, 0)),       # attn_pool
            pl.BlockSpec((BB, 1, L_pad), lambda i: (i, 0, 0)),        # alpha
        ],
        out_shape=[
            jax.ShapeDtypeStruct((B_pad, 1, Dm_pad), jnp.float32),
            jax.ShapeDtypeStruct((B_pad, 1, L_pad), jnp.float32),
        ],
        compiler_params=pltpu.CompilerParams(
            dimension_semantics=("parallel",),
            vmem_limit_bytes=32 * 1024 * 1024,
        ),
    )(M_p, xt_p, mask_p)

    attn_pool = pool_p[:B, 0, :Dm]
    alpha = alpha_p[:B, :, :L]
    return attn_pool, alpha


# ---------------------------------------------------------------------------
# Pure-JAX reference mirroring the PyTorch forward
# ---------------------------------------------------------------------------
def matching_attention_ref(M, x, W=None, b=None, mask=None, att_type='general'):
    L, B, Dm = M.shape
    if mask is None:
        mask = jnp.ones((B, L), jnp.float32)
    M_ = jnp.transpose(M, (1, 2, 0))                    # (B, Dm, L)
    if att_type == 'dot':
        x_ = x[:, None, :]
    else:
        xt = x @ W + (b if b is not None else 0.0)
        x_ = xt[:, None, :]
    if att_type == 'general2':
        mask_ = mask[:, None, :]                        # (B, 1, L)
        Mm = M_ * mask[:, None, :]
        a = jnp.einsum('bod,bdl->bol', x_, Mm) * mask_
        a = jnp.tanh(a)
        a = jax.nn.softmax(a, axis=2)
        am = a * mask_
        alpha = am / jnp.sum(am, axis=2, keepdims=True)
    else:
        scores = jnp.einsum('bod,bdl->bol', x_, M_)
        alpha = jax.nn.softmax(scores, axis=2)
    attn_pool = jnp.einsum('bol,bld->bod', alpha,
                           jnp.transpose(M, (1, 0, 2)))[:, 0, :]
    return attn_pool, alpha


# ---------------------------------------------------------------------------
if __name__ == "__main__":
    key = jax.random.PRNGKey(0)
    kM, kx, kW, kb, kM2, kx2 = jax.random.split(key, 6)

    L, B = 10, 4
    mem_dim, cand_dim = 96, 72

    M = 0.3 * jax.random.normal(kM, (L, B, mem_dim), jnp.float32)
    x = 0.3 * jax.random.normal(kx, (B, cand_dim), jnp.float32)
    a = (6.0 / (cand_dim + mem_dim)) ** 0.5
    W = jax.random.uniform(kW, (cand_dim, mem_dim), jnp.float32, -a, a)
    b = 0.05 * jax.random.normal(kb, (mem_dim,), jnp.float32)

    # att_type='general' (module default), mask=None
    out, alpha = matching_attention(M, x, W=W, att_type='general')
    out = jax.block_until_ready(out)
    ref_out, ref_alpha = matching_attention_ref(M, x, W=W, att_type='general')
    assert out.shape == (B, mem_dim) and alpha.shape == (B, 1, L)
    assert jnp.allclose(out, ref_out, rtol=2e-2, atol=2e-2), (out, ref_out)
    assert jnp.allclose(alpha, ref_alpha, rtol=2e-2, atol=2e-2)

    # att_type='general2' with a ragged (0/1) mask
    lengths = jnp.array([10, 7, 4, 9], jnp.int32)
    mask = (jnp.arange(L)[None, :] < lengths[:, None]).astype(jnp.float32)
    out2, alpha2 = matching_attention(M, x, W=W, b=b, mask=mask,
                                      att_type='general2')
    out2 = jax.block_until_ready(out2)
    ref_out2, ref_alpha2 = matching_attention_ref(M, x, W=W, b=b, mask=mask,
                                                  att_type='general2')
    assert jnp.allclose(out2, ref_out2, rtol=2e-2, atol=2e-2), (out2, ref_out2)
    assert jnp.allclose(alpha2, ref_alpha2, rtol=2e-2, atol=2e-2)

    # att_type='dot' (mem_dim == cand_dim), mask=None
    Md = 0.3 * jax.random.normal(kM2, (L, B, mem_dim), jnp.float32)
    xd = 0.3 * jax.random.normal(kx2, (B, mem_dim), jnp.float32)
    out3, alpha3 = matching_attention(Md, xd, att_type='dot')
    out3 = jax.block_until_ready(out3)
    ref_out3, ref_alpha3 = matching_attention_ref(Md, xd, att_type='dot')
    assert jnp.allclose(out3, ref_out3, rtol=2e-2, atol=2e-2), (out3, ref_out3)
    assert jnp.allclose(alpha3, ref_alpha3, rtol=2e-2, atol=2e-2)

    print("KERNEL_OK")
</pallas_src>

<mosaic_0001>
module attributes {stable_mosaic.version = 11 : i64} {
  func.func @_matching_attention_kernel(%arg0: i32, %arg1: memref<4x16x128xbf16, #tpu.memory_space<vmem>>, %arg2: memref<4x1x128xbf16, #tpu.memory_space<vmem>>, %arg3: memref<4x1x16xf32, #tpu.memory_space<vmem>>, %arg4: memref<4x1x128xf32, #tpu.memory_space<vmem>>, %arg5: memref<4x1x16xf32, #tpu.memory_space<vmem>>) attributes {dimension_semantics = [#tpu.dimension_semantics<parallel>], iteration_bounds = array<i64: 1>, scalar_prefetch = 0 : i64, scratch_operands = 0 : i64, tpu.core_type = #tpu.core_type<tc>, window_params = [{transform_indices = @transform_0, window_bounds = array<i64: 4, 16, 128>}, {transform_indices = @transform_1, window_bounds = array<i64: 4, 1, 128>}, {transform_indices = @transform_2, window_bounds = array<i64: 4, 1, 16>}, {transform_indices = @transform_3, window_bounds = array<i64: 4, 1, 128>}, {transform_indices = @transform_4, window_bounds = array<i64: 4, 1, 16>}]} {
    %c0 = arith.constant 0 : index
    %c0_0 = arith.constant 0 : index
    %c0_1 = arith.constant 0 : index
    %0 = vector.load %arg1[%c0, %c0_0, %c0_1] : memref<4x16x128xbf16, #tpu.memory_space<vmem>>, vector<4x16x128xbf16>
    %c0_2 = arith.constant 0 : index
    %c0_3 = arith.constant 0 : index
    %c0_4 = arith.constant 0 : index
    %1 = vector.load %arg2[%c0_2, %c0_3, %c0_4] : memref<4x1x128xbf16, #tpu.memory_space<vmem>>, vector<4x1x128xbf16>
    "tpu.trace_start"() <{level = 10 : i32, message = "bod,bld->bol"}> : () -> ()
    %cst = arith.constant dense<0.000000e+00> : vector<4x1x16xf32>
    %2 = tpu.matmul %1, %0, %cst {dimension_numbers = #tpu.dot_dimension_numbers<[2], [2], [1], [1], [0, 0, 0, 1, 1, 1], [0], [0]>} : vector<4x1x128xbf16>, vector<4x16x128xbf16>, vector<4x1x16xf32> -> vector<4x1x16xf32>
    "tpu.trace_stop"() : () -> ()
    %3 = tpu.iota {dimensions = array<i32: 2>} : vector<4x1x16xi32>
    %c10_i32 = arith.constant 10 : i32
    %4 = vector.broadcast %c10_i32 : i32 to vector<4x1x16xi32>
    %5 = arith.cmpi slt, %3, %4 : vector<4x1x16xi32>
    %cst_5 = arith.constant -1.000000e+30 : f32
    %6 = vector.broadcast %cst_5 : f32 to vector<4x1x16xf32>
    %7 = arith.select %5, %2, %6 : vector<4x1x16xi1>, vector<4x1x16xf32>
    %cst_6 = arith.constant dense<0xFF800000> : vector<4x1xf32>
    %8 = vector.multi_reduction <maximumf>, %7, %cst_6 [2] : vector<4x1x16xf32> to vector<4x1xf32>
    %9 = vector.shape_cast %8 : vector<4x1xf32> to vector<4x1x1xf32>
    %10 = vector.broadcast %9 : vector<4x1x1xf32> to vector<4x1x16xf32>
    %11 = arith.subf %7, %10 : vector<4x1x16xf32>
    %12 = math.exp %11 : vector<4x1x16xf32>
    %cst_7 = arith.constant 0.000000e+00 : f32
    %13 = vector.broadcast %cst_7 : f32 to vector<4x1x16xf32>
    %14 = arith.select %5, %12, %13 : vector<4x1x16xi1>, vector<4x1x16xf32>
    %cst_8 = arith.constant dense<0.000000e+00> : vector<4x1xf32>
    %15 = vector.multi_reduction <add>, %14, %cst_8 [2] : vector<4x1x16xf32> to vector<4x1xf32>
    %16 = vector.shape_cast %15 : vector<4x1xf32> to vector<4x1x1xf32>
    %17 = tpu.reciprocal %16 {approx = true} : vector<4x1x1xf32> -> vector<4x1x1xf32>
    %18 = vector.broadcast %17 : vector<4x1x1xf32> to vector<4x1x16xf32>
    %19 = arith.mulf %14, %18 : vector<4x1x16xf32>
    %20 = arith.truncf %19 : vector<4x1x16xf32> to vector<4x1x16xbf16>
    "tpu.trace_start"() <{level = 10 : i32, message = "bol,bld->bod"}> : () -> ()
    %cst_9 = arith.constant dense<0.000000e+00> : vector<4x1x128xf32>
    %21 = tpu.matmul %20, %0, %cst_9 {dimension_numbers = #tpu.dot_dimension_numbers<[2], [1], [1], [2], [0, 0, 0, 1, 1, 2], [0], [0]>} : vector<4x1x16xbf16>, vector<4x16x128xbf16>, vector<4x1x128xf32> -> vector<4x1x128xf32>
    "tpu.trace_stop"() : () -> ()
    %c0_10 = arith.constant 0 : index
    %c0_11 = arith.constant 0 : index
    %c0_12 = arith.constant 0 : index
    %22 = vector.load %arg5[%c0_10, %c0_11, %c0_12] : memref<4x1x16xf32, #tpu.memory_space<vmem>>, vector<4x1x16xf32>
    tpu.vector_store %arg5[%c0_10, %c0_11, %c0_12], %19 {strides = array<i32>} : memref<4x1x16xf32, #tpu.memory_space<vmem>>, vector<4x1x16xf32>,
    %c0_13 = arith.constant 0 : index
    %c0_14 = arith.constant 0 : index
    %c0_15 = arith.constant 0 : index
    %23 = vector.load %arg4[%c0_13, %c0_14, %c0_15] : memref<4x1x128xf32, #tpu.memory_space<vmem>>, vector<4x1x128xf32>
    tpu.vector_store %arg4[%c0_13, %c0_14, %c0_15], %21 {strides = array<i32>} : memref<4x1x128xf32, #tpu.memory_space<vmem>>, vector<4x1x128xf32>,
    return
  }
  func.func @transform_0(%arg0: i32) -> (i32, i32, i32) {
    %c0_i32 = arith.constant 0 : i32
    %c0_i32_0 = arith.constant 0 : i32
    %c0_i32_1 = arith.constant 0 : i32
    return %arg0, %c0_i32, %c0_i32_0 : i32, i32, i32
  }
  func.func @transform_1(%arg0: i32) -> (i32, i32, i32) {
    %c0_i32 = arith.constant 0 : i32
    %c0_i32_0 = arith.constant 0 : i32
    %c0_i32_1 = arith.constant 0 : i32
    return %arg0, %c0_i32, %c0_i32_0 : i32, i32, i32
  }
  func.func @transform_2(%arg0: i32) -> (i32, i32, i32) {
    %c0_i32 = arith.constant 0 : i32
    %c0_i32_0 = arith.constant 0 : i32
    %c0_i32_1 = arith.constant 0 : i32
    return %arg0, %c0_i32, %c0_i32_0 : i32, i32, i32
  }
  func.func @transform_3(%arg0: i32) -> (i32, i32, i32) {
    %c0_i32 = arith.constant 0 : i32
    %c0_i32_0 = arith.constant 0 : i32
    %c0_i32_1 = arith.constant 0 : i32
    return %arg0, %c0_i32, %c0_i32_0 : i32, i32, i32
  }
  func.func @transform_4(%arg0: i32) -> (i32, i32, i32) {
    %c0_i32 = arith.constant 0 : i32
    %c0_i32_0 = arith.constant 0 : i32
    %c0_i32_1 = arith.constant 0 : i32
    return %arg0, %c0_i32, %c0_i32_0 : i32, i32, i32
  }
}

</mosaic_0001>

<llo_original>
// kernel: tpu_custom_call.1
$region0: #{tpu_custom_call.1}
  #allocation0 [shape = 'u32[]', space=smem, size = 0x4, offset = 0x4, fixed_abs, tag = 'smem constant byte address 0x4 - core index']
  #allocation1 [shape = 'u32[144,128]{1,0:T(1,128)}', space=vmem, size = 0x12000, scoped, tag = 'internal scratch']
  %s0 = inlined_call_operand.hbm [shape: bf16[4,16,128], index: 0, kind: input, shape index: {}]
  %s1 = inlined_call_operand.vmem [shape: bf16[4,1,128], index: 1, kind: input, shape index: {}]
  %s2 = inlined_call_operand.vmem [shape: f32[4,1,16], index: 2, kind: input, shape index: {}]
  %s3 = inlined_call_operand.hbm [shape: f32[4,1,128], index: 3, kind: output, shape index: {0}]
  %s4 = inlined_call_operand.hbm [shape: f32[4,1,16], index: 4, kind: output, shape index: {1}]
  %5 = xla_tuple %s3, %s4
  %s6 = sld [smem:[#allocation0]]
  $region34: #{tpu_custom_call.1} parent=0
    _
  %s8 = ssub.s32 1, %s6
  %s9 = scalar_select 0, %s8, %s6
  $region1: #{tpu_custom_call.1} parent=0
    #allocation2 [shape = 'u8[16384]{0}', space=vmem, size = 0x4000, scoped, tag = 'input window, operand 0, single buffered']
    #allocation3 [shape = 's32[1]{0}', space=sflag, size = 0x4, scoped, tag = 'scoped memory for tpu_custom_call.1']
    #allocation4 [shape = 's32[1]{0}', space=sflag, size = 0x4, scoped, tag = 'scoped memory for tpu_custom_call.1']
    #allocation5 [shape = 'u8[2048]{0}', space=vmem, size = 0x800, scoped, tag = 'output window, operand 0, single buffered']
    #allocation6 [shape = 'u8[2048]{0}', space=vmem, size = 0x800, scoped, tag = 'output window, operand 1, single buffered']
    #allocation7 [shape = 's32[1]{0}', space=sflag, size = 0x4, scoped, tag = 'scoped memory for tpu_custom_call.1']
    %10 = vsyncpa [#allocation3], 0
    %11 = vsyncpa [#allocation4], 0
    %12 = vsyncpa [#allocation7], 0
    // Predicated region
    $region2: #{tpu_custom_call.1} parent=1 // pred_check
      _
    $region3: #{tpu_custom_call.1} parent=1 // pred_check_branch
      %14 = sbr.rel (0) target = $region5
    $region4: #{tpu_custom_call.1} parent=1 // pred_region
      %s16 = ssub.s32 512, 512
      %17 = vsyncadd [#allocation3], %s16
      %s18 = sshll.u32 [#allocation2], 4
      %s19 = int_to_ptr.vmem [resolvable:$true] %s18
      %24 = dma.hbm_to_vmem [thread:$0]  %s0, 512, %s19, [#allocation3], 64, 64, 4
    $region5: #{tpu_custom_call.1} parent=1 // pred_fallthru
      _
    // Predicated region
    $region6: #{tpu_custom_call.1} parent=1 // pred_check
      _
    $region7: #{tpu_custom_call.1} parent=1 // pred_check_branch
      %26 = sbr.rel (0) target = $region9
    $region8: #{tpu_custom_call.1} parent=1 // pred_region
      _
    $region9: #{tpu_custom_call.1} parent=1 // pred_fallthru
      _
    // Predicated region
    $region10: #{tpu_custom_call.1} parent=1 // pred_check
      _
    $region11: #{tpu_custom_call.1} parent=1 // pred_check_branch
      %28 = sbr.rel (0) target = $region13
    $region12: #{tpu_custom_call.1} parent=1 // pred_region
      _
    $region13: #{tpu_custom_call.1} parent=1 // pred_fallthru
      _
    // Predicated region
    $region14: #{tpu_custom_call.1} parent=1 // pred_check
      _
    $region15: #{tpu_custom_call.1} parent=1 // pred_check_branch
      %30 = sbr.rel (0) target = $region17
    $region16: #{tpu_custom_call.1} parent=1 // pred_region
      %31 = dma.done [#allocation3], 512
    $region17: #{tpu_custom_call.1} parent=1 // pred_fallthru
      _
    %v33 = vld [vmem:[#allocation2] sm:$0xf]
    %v34 = vld [vmem:[#allocation2 + $0x4] sm:$0xf]
    %v35 = vld [vmem:[#allocation2 + $0x8] sm:$0xf]
    %v36 = vld [vmem:[#allocation2 + $0xc] sm:$0xf]
    %v37 = vld [vmem:[#allocation2 + $0x10] sm:$0xf]
    %v38 = vld [vmem:[#allocation2 + $0x14] sm:$0xf]
    %v39 = vld [vmem:[#allocation2 + $0x18] sm:$0xf]
    %v40 = vld [vmem:[#allocation2 + $0x1c] sm:$0xf]
    %v41 = vld [vmem:[%s1] sm:$0x1]
    %v42 = vld [vmem:[%s1 + $0x1] sm:$0x1]
    %v43 = vld [vmem:[%s1 + $0x2] sm:$0x1]
    %v44 = vld [vmem:[%s1 + $0x3] sm:$0x1]
    %v47 = vunpack.c.l.b16 %v33
    %v48 = vunpack.c.l.b16 %v34
    %v49 = vpack.c.b16 %v48, %v47
    %51 = vmatprep.subr.bf16.mxu0 0
    %52 = vmatpush1.bf16.xpose.msra.mxu0 %v49
    %53 = vmatprep.subr.bf16.mxu0 0
    %54 = vmatpush1.bf16.xpose.msra.mxu0 0
    %55 = vmatprep.subr.bf16.mxu0 0
    %56 = vmatpush1.bf16.xpose.msra.mxu0 0
    %57 = vmatprep.subr.bf16.mxu0 0
    %58 = vmatpush1.bf16.xpose.msra.mxu0 0
    %59 = vmatprep.subr.bf16.mxu0 0
    %60 = vmatpush1.bf16.xpose.msra.mxu0 0
    %61 = vmatprep.subr.bf16.mxu0 0
    %62 = vmatpush1.bf16.xpose.msra.mxu0 0
    %63 = vmatprep.subr.bf16.mxu0 0
    %64 = vmatpush1.bf16.xpose.msra.mxu0 0
    %65 = vmatprep.subr.bf16.mxu0 0
    %66 = vmatpush1.bf16.xpose.msra.mxu0 0
    %67 = vmatprep.subr.bf16.mxu0 0
    %68 = vmatpush1.bf16.xpose.msra.mxu0 0
    %69 = vmatprep.subr.bf16.mxu0 0
    %70 = vmatpush1.bf16.xpose.msra.mxu0 0
    %71 = vmatprep.subr.bf16.mxu0 0
    %72 = vmatpush1.bf16.xpose.msra.mxu0 0
    %73 = vmatprep.subr.bf16.mxu0 0
    %74 = vmatpush1.bf16.xpose.msra.mxu0 0
    %75 = vmatprep.subr.bf16.mxu0 0
    %76 = vmatpush1.bf16.xpose.msra.mxu0 0
    %77 = vmatprep.subr.bf16.mxu0 0
    %78 = vmatpush1.bf16.xpose.msra.mxu0 0
    %79 = vmatprep.subr.bf16.mxu0 0
    %80 = vmatpush1.bf16.xpose.msra.mxu0 0
    %81 = vmatprep.subr.bf16.mxu0 0
    %82 = vmatpush1.bf16.xpose.msra.mxu0 0
    %83 = vmatprep.mubr.bf16.mxu0 0
    %84 = vmatmul.mubr.bf16.gmra.mrb[0].mxu0 %v41
    %v85 = vpop.f32.mrb[0].mxu0
    %v86 = vadd.f32 0.0, %v85
    %v87 = vpop.f32.mrb[0].mxu0
    %v88 = vpop.f32.mrb[0].mxu0
    %v89 = vpop.f32.mrb[0].mxu0
    %90 = vdwg.mxu0
    %v93 = vunpack.c.l.b16 %v35
    %v94 = vunpack.c.l.b16 %v36
    %v95 = vpack.c.b16 %v94, %v93
    %97 = vmatprep.subr.bf16.mxu0 0
    %98 = vmatpush1.bf16.xpose.msra.mxu0 %v95
    %99 = vmatprep.subr.bf16.mxu0 0
    %100 = vmatpush1.bf16.xpose.msra.mxu0 0
    %101 = vmatprep.subr.bf16.mxu0 0
    %102 = vmatpush1.bf16.xpose.msra.mxu0 0
    %103 = vmatprep.subr.bf16.mxu0 0
    %104 = vmatpush1.bf16.xpose.msra.mxu0 0
    %105 = vmatprep.subr.bf16.mxu0 0
    %106 = vmatpush1.bf16.xpose.msra.mxu0 0
    %107 = vmatprep.subr.bf16.mxu0 0
    %108 = vmatpush1.bf16.xpose.msra.mxu0 0
    %109 = vmatprep.subr.bf16.mxu0 0
    %110 = vmatpush1.bf16.xpose.msra.mxu0 0
    %111 = vmatprep.subr.bf16.mxu0 0
    %112 = vmatpush1.bf16.xpose.msra.mxu0 0
    %113 = vmatprep.subr.bf16.mxu0 0
    %114 = vmatpush1.bf16.xpose.msra.mxu0 0
    %115 = vmatprep.subr.bf16.mxu0 0
    %116 = vmatpush1.bf16.xpose.msra.mxu0 0
    %117 = vmatprep.subr.bf16.mxu0 0
    %118 = vmatpush1.bf16.xpose.msra.mxu0 0
    %119 = vmatprep.subr.bf16.mxu0 0
    %120 = vmatpush1.bf16.xpose.msra.mxu0 0
    %121 = vmatprep.subr.bf16.mxu0 0
    %122 = vmatpush1.bf16.xpose.msra.mxu0 0
    %123 = vmatprep.subr.bf16.mxu0 0
    %124 = vmatpush1.bf16.xpose.msra.mxu0 0
    %125 = vmatprep.subr.bf16.mxu0 0
    %126 = vmatpush1.bf16.xpose.msra.mxu0 0
    %127 = vmatprep.subr.bf16.mxu0 0
    %128 = vmatpush1.bf16.xpose.msra.mxu0 0
    %129 = vmatprep.mubr.bf16.mxu0 0
    %130 = vmatmul.mubr.bf16.gmra.mrb[0].mxu0 %v42
    %v131 = vpop.f32.mrb[0].mxu0
    %v132 = vadd.f32 0.0, %v131
    %v133 = vpop.f32.mrb[0].mxu0
    %v134 = vpop.f32.mrb[0].mxu0
    %v135 = vpop.f32.mrb[0].mxu0
    %136 = vdwg.mxu0
    %v139 = vunpack.c.l.b16 %v37
    %v140 = vunpack.c.l.b16 %v38
    %v141 = vpack.c.b16 %v140, %v139
    %143 = vmatprep.subr.bf16.mxu0 0
    %144 = vmatpush1.bf16.xpose.msra.mxu0 %v141
    %145 = vmatprep.subr.bf16.mxu0 0
    %146 = vmatpush1.bf16.xpose.msra.mxu0 0
    %147 = vmatprep.subr.bf16.mxu0 0
    %148 = vmatpush1.bf16.xpose.msra.mxu0 0
    %149 = vmatprep.subr.bf16.mxu0 0
    %150 = vmatpush1.bf16.xpose.msra.mxu0 0
    %151 = vmatprep.subr.bf16.mxu0 0
    %152 = vmatpush1.bf16.xpose.msra.mxu0 0
    %153 = vmatprep.subr.bf16.mxu0 0
    %154 = vmatpush1.bf16.xpose.msra.mxu0 0
    %155 = vmatprep.subr.bf16.mxu0 0
    %156 = vmatpush1.bf16.xpose.msra.mxu0 0
    %157 = vmatprep.subr.bf16.mxu0 0
    %158 = vmatpush1.bf16.xpose.msra.mxu0 0
    %159 = vmatprep.subr.bf16.mxu0 0
    %160 = vmatpush1.bf16.xpose.msra.mxu0 0
    %161 = vmatprep.subr.bf16.mxu0 0
    %162 = vmatpush1.bf16.xpose.msra.mxu0 0
    %163 = vmatprep.subr.bf16.mxu0 0
    %164 = vmatpush1.bf16.xpose.msra.mxu0 0
    %165 = vmatprep.subr.bf16.mxu0 0
    %166 = vmatpush1.bf16.xpose.msra.mxu0 0
    %167 = vmatprep.subr.bf16.mxu0 0
    %168 = vmatpush1.bf16.xpose.msra.mxu0 0
    %169 = vmatprep.subr.bf16.mxu0 0
    %170 = vmatpush1.bf16.xpose.msra.mxu0 0
    %171 = vmatprep.subr.bf16.mxu0 0
    %172 = vmatpush1.bf16.xpose.msra.mxu0 0
    %173 = vmatprep.subr.bf16.mxu0 0
    %174 = vmatpush1.bf16.xpose.msra.mxu0 0
    %175 = vmatprep.mubr.bf16.mxu0 0
    %176 = vmatmul.mubr.bf16.gmra.mrb[0].mxu0 %v43
    %v177 = vpop.f32.mrb[0].mxu0
    %v178 = vadd.f32 0.0, %v177
    %v179 = vpop.f32.mrb[0].mxu0
    %v180 = vpop.f32.mrb[0].mxu0
    %v181 = vpop.f32.mrb[0].mxu0
    %182 = vdwg.mxu0
    %v185 = vunpack.c.l.b16 %v39
    %v186 = vunpack.c.l.b16 %v40
    %v187 = vpack.c.b16 %v186, %v185
    %189 = vmatprep.subr.bf16.mxu0 0
    %190 = vmatpush1.bf16.xpose.msra.mxu0 %v187
    %191 = vmatprep.subr.bf16.mxu0 0
    %192 = vmatpush1.bf16.xpose.msra.mxu0 0
    %193 = vmatprep.subr.bf16.mxu0 0
    %194 = vmatpush1.bf16.xpose.msra.mxu0 0
    %195 = vmatprep.subr.bf16.mxu0 0
    %196 = vmatpush1.bf16.xpose.msra.mxu0 0
    %197 = vmatprep.subr.bf16.mxu0 0
    %198 = vmatpush1.bf16.xpose.msra.mxu0 0
    %199 = vmatprep.subr.bf16.mxu0 0
    %200 = vmatpush1.bf16.xpose.msra.mxu0 0
    %201 = vmatprep.subr.bf16.mxu0 0
    %202 = vmatpush1.bf16.xpose.msra.mxu0 0
    %203 = vmatprep.subr.bf16.mxu0 0
    %204 = vmatpush1.bf16.xpose.msra.mxu0 0
    %205 = vmatprep.subr.bf16.mxu0 0
    %206 = vmatpush1.bf16.xpose.msra.mxu0 0
    %207 = vmatprep.subr.bf16.mxu0 0
    %208 = vmatpush1.bf16.xpose.msra.mxu0 0
    %209 = vmatprep.subr.bf16.mxu0 0
    %210 = vmatpush1.bf16.xpose.msra.mxu0 0
    %211 = vmatprep.subr.bf16.mxu0 0
    %212 = vmatpush1.bf16.xpose.msra.mxu0 0
    %213 = vmatprep.subr.bf16.mxu0 0
    %214 = vmatpush1.bf16.xpose.msra.mxu0 0
    %215 = vmatprep.subr.bf16.mxu0 0
    %216 = vmatpush1.bf16.xpose.msra.mxu0 0
    %217 = vmatprep.subr.bf16.mxu0 0
    %218 = vmatpush1.bf16.xpose.msra.mxu0 0
    %219 = vmatprep.subr.bf16.mxu0 0
    %220 = vmatpush1.bf16.xpose.msra.mxu0 0
    %221 = vmatprep.mubr.bf16.mxu0 0
    %222 = vmatmul.mubr.bf16.gmra.mrb[0].mxu0 %v44
    %v223 = vpop.f32.mrb[0].mxu0
    %v224 = vadd.f32 0.0, %v223
    %v225 = vpop.f32.mrb[0].mxu0
    %v226 = vpop.f32.mrb[0].mxu0
    %v227 = vpop.f32.mrb[0].mxu0
    %228 = vdwg.mxu0
    %v229 = vlaneseq
    %v230 = vand.u32 %v229, 127
    %vm231 = vcmp.lt.s32.totalorder %v230, 10
    %v232 = vsel %vm231, %v86, -1e+30
    %v233 = vsel %vm231, %v132, -1e+30
    %v234 = vsel %vm231, %v178, -1e+30
    %v235 = vsel %vm231, %v224, -1e+30
    %vm236 = vcmask 122880
    %v237 = vsel %vm236, %v232, -inf
    %238 = vmax.xlane.f32.xlu0 %v237
    %v239 = vpop.xlane.xlu0 %238
    %v240 = vsel %vm236, %v233, -inf
    %241 = vmax.xlane.f32.xlu0 %v240
    %v242 = vpop.xlane.xlu0 %241
    %v243 = vsel %vm236, %v234, -inf
    %244 = vmax.xlane.f32.xlu0 %v243
    %v245 = vpop.xlane.xlu0 %244
    %v246 = vsel %vm236, %v235, -inf
    %247 = vmax.xlane.f32.xlu0 %v246
    %v248 = vpop.xlane.xlu0 %247
    %v249 = vsub.f32 %v232, %v239
    %v250 = vsub.f32 %v233, %v242
    %v251 = vsub.f32 %v234, %v245
    %v252 = vsub.f32 %v235, %v248
    %v253 = vmul.f32 %v249, 1.442695
    %v254 = vpow.pop %v253
    %v255 = vmul.f32 %v250, 1.442695
    %v256 = vpow.pop %v255
    %v257 = vmul.f32 %v251, 1.442695
    %v258 = vpow.pop %v257
    %v259 = vmul.f32 %v252, 1.442695
    %v260 = vpow.pop %v259
    %v261 = vsel %vm231, %v254, 0.0
    %v262 = vsel %vm231, %v256, 0.0
    %v263 = vsel %vm231, %v258, 0.0
    %v264 = vsel %vm231, %v260, 0.0
    %v265 = vsel %vm236, %v261, 0.0
    %266 = vadd.xlane.f32.xlu0 %v265
    %v267 = vpop.xlane.xlu0 %266
    %v268 = vsel %vm236, %v262, 0.0
    %269 = vadd.xlane.f32.xlu0 %v268
    %v270 = vpop.xlane.xlu0 %269
    %v271 = vsel %vm236, %v263, 0.0
    %272 = vadd.xlane.f32.xlu0 %v271
    %v273 = vpop.xlane.xlu0 %272
    %v274 = vsel %vm236, %v264, 0.0
    %275 = vadd.xlane.f32.xlu0 %v274
    %v276 = vpop.xlane.xlu0 %275
    %v277 = vrcp.pop %v267
    %v278 = vrcp.pop %v270
    %v279 = vrcp.pop %v273
    %v280 = vrcp.pop %v276
    %v281 = vmul.f32 %v261, %v277
    %v282 = vmul.f32 %v262, %v278
    %v283 = vmul.f32 %v263, %v279
    %v284 = vmul.f32 %v264, %v280
    %v285 = vpack.c.bf16 %v281, %v281
    %v286 = vpack.c.bf16 %v282, %v282
    %v287 = vpack.c.bf16 %v283, %v283
    %v288 = vpack.c.bf16 %v284, %v284
    %vm289 = vcmask 130048
    %v291 = vsel %vm289, %v285, 0
    %293 = vmatprep.subr.bf16.mxu0 0
    %294 = vmatpush1.bf16.msra.mxu0 %v49
    %295 = vmatprep.subr.bf16.mxu0 0
    %296 = vmatpush1.bf16.msra.mxu0 0
    %297 = vmatprep.subr.bf16.mxu0 0
    %298 = vmatpush1.bf16.msra.mxu0 0
    %299 = vmatprep.subr.bf16.mxu0 0
    %300 = vmatpush1.bf16.msra.mxu0 0
    %301 = vmatprep.subr.bf16.mxu0 0
    %302 = vmatpush1.bf16.msra.mxu0 0
    %303 = vmatprep.subr.bf16.mxu0 0
    %304 = vmatpush1.bf16.msra.mxu0 0
    %305 = vmatprep.subr.bf16.mxu0 0
    %306 = vmatpush1.bf16.msra.mxu0 0
    %307 = vmatprep.subr.bf16.mxu0 0
    %308 = vmatpush1.bf16.msra.mxu0 0
    %309 = vmatprep.subr.bf16.mxu0 0
    %310 = vmatpush1.bf16.msra.mxu0 0
    %311 = vmatprep.subr.bf16.mxu0 0
    %312 = vmatpush1.bf16.msra.mxu0 0
    %313 = vmatprep.subr.bf16.mxu0 0
    %314 = vmatpush1.bf16.msra.mxu0 0
    %315 = vmatprep.subr.bf16.mxu0 0
    %316 = vmatpush1.bf16.msra.mxu0 0
    %317 = vmatprep.subr.bf16.mxu0 0
    %318 = vmatpush1.bf16.msra.mxu0 0
    %319 = vmatprep.subr.bf16.mxu0 0
    %320 = vmatpush1.bf16.msra.mxu0 0
    %321 = vmatprep.subr.bf16.mxu0 0
    %322 = vmatpush1.bf16.msra.mxu0 0
    %323 = vmatprep.subr.bf16.mxu0 0
    %324 = vmatpush1.bf16.msra.mxu0 0
    %325 = vmatprep.mubr.bf16.mxu0 0
    %326 = vmatmul.mubr.bf16.gmra.mrb[0].mxu0 %v291
    %v327 = vpop.f32.mrb[0].mxu0
    %v328 = vadd.f32 0.0, %v327
    %v329 = vpop.f32.mrb[0].mxu0
    %v330 = vpop.f32.mrb[0].mxu0
    %v331 = vpop.f32.mrb[0].mxu0
    %332 = vdwg.mxu0
    %v334 = vsel %vm289, %v286, 0
    %336 = vmatprep.subr.bf16.mxu0 0
    %337 = vmatpush1.bf16.msra.mxu0 %v95
    %338 = vmatprep.subr.bf16.mxu0 0
    %339 = vmatpush1.bf16.msra.mxu0 0
    %340 = vmatprep.subr.bf16.mxu0 0
    %341 = vmatpush1.bf16.msra.mxu0 0
    %342 = vmatprep.subr.bf16.mxu0 0
    %343 = vmatpush1.bf16.msra.mxu0 0
    %344 = vmatprep.subr.bf16.mxu0 0
    %345 = vmatpush1.bf16.msra.mxu0 0
    %346 = vmatprep.subr.bf16.mxu0 0
    %347 = vmatpush1.bf16.msra.mxu0 0
    %348 = vmatprep.subr.bf16.mxu0 0
    %349 = vmatpush1.bf16.msra.mxu0 0
    %350 = vmatprep.subr.bf16.mxu0 0
    %351 = vmatpush1.bf16.msra.mxu0 0
    %352 = vmatprep.subr.bf16.mxu0 0
    %353 = vmatpush1.bf16.msra.mxu0 0
    %354 = vmatprep.subr.bf16.mxu0 0
    %355 = vmatpush1.bf16.msra.mxu0 0
    %356 = vmatprep.subr.bf16.mxu0 0
    %357 = vmatpush1.bf16.msra.mxu0 0
    %358 = vmatprep.subr.bf16.mxu0 0
    %359 = vmatpush1.bf16.msra.mxu0 0
    %360 = vmatprep.subr.bf16.mxu0 0
    %361 = vmatpush1.bf16.msra.mxu0 0
    %362 = vmatprep.subr.bf16.mxu0 0
    %363 = vmatpush1.bf16.msra.mxu0 0
    %364 = vmatprep.subr.bf16.mxu0 0
    %365 = vmatpush1.bf16.msra.mxu0 0
    %366 = vmatprep.subr.bf16.mxu0 0
    %367 = vmatpush1.bf16.msra.mxu0 0
    %368 = vmatprep.mubr.bf16.mxu0 0
    %369 = vmatmul.mubr.bf16.gmra.mrb[0].mxu0 %v334
    %v370 = vpop.f32.mrb[0].mxu0
    %v371 = vadd.f32 0.0, %v370
    %v372 = vpop.f32.mrb[0].mxu0
    %v373 = vpop.f32.mrb[0].mxu0
    %v374 = vpop.f32.mrb[0].mxu0
    %375 = vdwg.mxu0
    %v377 = vsel %vm289, %v287, 0
    %379 = vmatprep.subr.bf16.mxu0 0
    %380 = vmatpush1.bf16.msra.mxu0 %v141
    %381 = vmatprep.subr.bf16.mxu0 0
    %382 = vmatpush1.bf16.msra.mxu0 0
    %383 = vmatprep.subr.bf16.mxu0 0
    %384 = vmatpush1.bf16.msra.mxu0 0
    %385 = vmatprep.subr.bf16.mxu0 0
    %386 = vmatpush1.bf16.msra.mxu0 0
    %387 = vmatprep.subr.bf16.mxu0 0
    %388 = vmatpush1.bf16.msra.mxu0 0
    %389 = vmatprep.subr.bf16.mxu0 0
    %390 = vmatpush1.bf16.msra.mxu0 0
    %391 = vmatprep.subr.bf16.mxu0 0
    %392 = vmatpush1.bf16.msra.mxu0 0
    %393 = vmatprep.subr.bf16.mxu0 0
    %394 = vmatpush1.bf16.msra.mxu0 0
    %395 = vmatprep.subr.bf16.mxu0 0
    %396 = vmatpush1.bf16.msra.mxu0 0
    %397 = vmatprep.subr.bf16.mxu0 0
    %398 = vmatpush1.bf16.msra.mxu0 0
    %399 = vmatprep.subr.bf16.mxu0 0
    %400 = vmatpush1.bf16.msra.mxu0 0
    %401 = vmatprep.subr.bf16.mxu0 0
    %402 = vmatpush1.bf16.msra.mxu0 0
    %403 = vmatprep.subr.bf16.mxu0 0
    %404 = vmatpush1.bf16.msra.mxu0 0
    %405 = vmatprep.subr.bf16.mxu0 0
    %406 = vmatpush1.bf16.msra.mxu0 0
    %407 = vmatprep.subr.bf16.mxu0 0
    %408 = vmatpush1.bf16.msra.mxu0 0
    %409 = vmatprep.subr.bf16.mxu0 0
    %410 = vmatpush1.bf16.msra.mxu0 0
    %411 = vmatprep.mubr.bf16.mxu0 0
    %412 = vmatmul.mubr.bf16.gmra.mrb[0].mxu0 %v377
    %v413 = vpop.f32.mrb[0].mxu0
    %v414 = vadd.f32 0.0, %v413
    %v415 = vpop.f32.mrb[0].mxu0
    %v416 = vpop.f32.mrb[0].mxu0
    %v417 = vpop.f32.mrb[0].mxu0
    %418 = vdwg.mxu0
    %v420 = vsel %vm289, %v288, 0
    %422 = vmatprep.subr.bf16.mxu0 0
    %423 = vmatpush1.bf16.msra.mxu0 %v187
    %424 = vmatprep.subr.bf16.mxu0 0
    %425 = vmatpush1.bf16.msra.mxu0 0
    %426 = vmatprep.subr.bf16.mxu0 0
    %427 = vmatpush1.bf16.msra.mxu0 0
    %428 = vmatprep.subr.bf16.mxu0 0
    %429 = vmatpush1.bf16.msra.mxu0 0
    %430 = vmatprep.subr.bf16.mxu0 0
    %431 = vmatpush1.bf16.msra.mxu0 0
    %432 = vmatprep.subr.bf16.mxu0 0
    %433 = vmatpush1.bf16.msra.mxu0 0
    %434 = vmatprep.subr.bf16.mxu0 0
    %435 = vmatpush1.bf16.msra.mxu0 0
    %436 = vmatprep.subr.bf16.mxu0 0
    %437 = vmatpush1.bf16.msra.mxu0 0
    %438 = vmatprep.subr.bf16.mxu0 0
    %439 = vmatpush1.bf16.msra.mxu0 0
    %440 = vmatprep.subr.bf16.mxu0 0
    %441 = vmatpush1.bf16.msra.mxu0 0
    %442 = vmatprep.subr.bf16.mxu0 0
    %443 = vmatpush1.bf16.msra.mxu0 0
    %444 = vmatprep.subr.bf16.mxu0 0
    %445 = vmatpush1.bf16.msra.mxu0 0
    %446 = vmatprep.subr.bf16.mxu0 0
    %447 = vmatpush1.bf16.msra.mxu0 0
    %448 = vmatprep.subr.bf16.mxu0 0
    %449 = vmatpush1.bf16.msra.mxu0 0
    %450 = vmatprep.subr.bf16.mxu0 0
    %451 = vmatpush1.bf16.msra.mxu0 0
    %452 = vmatprep.subr.bf16.mxu0 0
    %453 = vmatpush1.bf16.msra.mxu0 0
    %454 = vmatprep.mubr.bf16.mxu0 0
    %455 = vmatmul.mubr.bf16.gmra.mrb[0].mxu0 %v420
    %v456 = vpop.f32.mrb[0].mxu0
    %v457 = vadd.f32 0.0, %v456
    %v458 = vpop.f32.mrb[0].mxu0
    %v459 = vpop.f32.mrb[0].mxu0
    %v460 = vpop.f32.mrb[0].mxu0
    %461 = vdwg.mxu0
    %462 = vst.msk [vmem:[#allocation6] sm:$0x1] %vm236, %v281
    %463 = vst.msk [vmem:[#allocation6 + $0x1] sm:$0x1] %vm236, %v282
    %464 = vst.msk [vmem:[#allocation6 + $0x2] sm:$0x1] %vm236, %v283
    %465 = vst.msk [vmem:[#allocation6 + $0x3] sm:$0x1] %vm236, %v284
    %466 = vst [vmem:[#allocation5] sm:$0x1] %v328
    %467 = vst [vmem:[#allocation5 + $0x1] sm:$0x1] %v371
    %468 = vst [vmem:[#allocation5 + $0x2] sm:$0x1] %v414
    %469 = vst [vmem:[#allocation5 + $0x3] sm:$0x1] %v457
    // Predicated region
    $region18: #{tpu_custom_call.1} parent=1 // pred_check
      _
    $region19: #{tpu_custom_call.1} parent=1 // pred_check_branch
      %471 = sbr.rel (0) target = $region21
    $region20: #{tpu_custom_call.1} parent=1 // pred_region
      %s473 = ssub.s32 64, 64
      %474 = vsyncadd [#allocation4], %s473
      %s475 = sshll.u32 [#allocation5], 4
      %s476 = int_to_ptr.vmem [resolvable:$true] %s475
      %481 = dma.vmem_to_hbm [thread:$0]  %s476, 64, %s3, [#allocation4], 16, 16, 1
    $region21: #{tpu_custom_call.1} parent=1 // pred_fallthru
      _
    // Predicated region
    $region22: #{tpu_custom_call.1} parent=1 // pred_check
      _
    $region23: #{tpu_custom_call.1} parent=1 // pred_check_branch
      %483 = sbr.rel (0) target = $region25
    $region24: #{tpu_custom_call.1} parent=1 // pred_region
      %s485 = ssub.s32 64, 64
      %486 = vsyncadd [#allocation7], %s485
      %s487 = sshll.u32 [#allocation6], 4
      %s488 = int_to_ptr.vmem [resolvable:$true] %s487
      %493 = dma.vmem_to_hbm [thread:$0]  %s488, 64, %s4, [#allocation7], 16, 16, 1
    $region25: #{tpu_custom_call.1} parent=1 // pred_fallthru
      _
    // Predicated region
    $region26: #{tpu_custom_call.1} parent=1 // pred_check
      _
    $region27: #{tpu_custom_call.1} parent=1 // pred_check_branch
      %495 = sbr.rel (0) target = $region29
    $region28: #{tpu_custom_call.1} parent=1 // pred_region
      %496 = dma.done [#allocation4], 64
    $region29: #{tpu_custom_call.1} parent=1 // pred_fallthru
      _
    // Predicated region
    $region30: #{tpu_custom_call.1} parent=1 // pred_check
      _
    $region31: #{tpu_custom_call.1} parent=1 // pred_check_branch
      %498 = sbr.rel (0) target = $region33
    $region32: #{tpu_custom_call.1} parent=1 // pred_region
      %499 = dma.done [#allocation7], 64
    $region33: #{tpu_custom_call.1} parent=1 // pred_fallthru
      _
    %500 = vsyncpa [#allocation3], 1
    %501 = vsyncpa [#allocation4], 1
    %502 = vsyncpa [#allocation7], 1

</llo_original>
